<compile_context>
chip_gen: v5e
topology: v5e:2x2
jax: 0.10.0
libtpu: 0.0.40
codegen_flags: <defaults>
</compile_context>

<pallas_src>
import functools

import jax
import jax.numpy as jnp
from jax import lax
from jax.experimental import pallas as pl
from jax.experimental.pallas import tpu as pltpu

# ----------------------------- model config ---------------------------------
NUM_USERS = 10
NUM_FILMS = 12
EMBED_DIM = 32
OUTPUT_RANGE = (1, 5)
NORM_MIN = float(min(OUTPUT_RANGE))
# Matches the PyTorch module exactly: abs(hi - lo) + 1  (= 5.0 here).
NORM_RANGE = float(abs(OUTPUT_RANGE[1] - OUTPUT_RANGE[0]) + 1)

MAX_TB = 16384   # max batch-tile width on the lane axis (multiple of 256)


def _round_up(x, m):
    return (x + m - 1) // m * m


def _pick_tile(b_sz):
    """Batch-adaptive lane tile: one step for small batches, >=2 fat tiles for big ones."""
    width = _round_up(max(b_sz, 1), 256)
    if width <= 4096:
        return width                                   # single grid step
    return min(MAX_TB, _round_up((width + 1) // 2, 256))  # >=2 tiles (v7x megacore)


# ------------------------------- kernel -------------------------------------
def gmf_kernel(pidx_ref, g_ref, b_ref, o_ref):
    """One batch tile of the collapsed GMF forward pass.

    pidx_ref : (1, TB) int32          packed indices (uidx << 16) | iidx, batch on lanes
    g_ref    : (NU_PAD, NI_PAD) f32   bilinear score table G = (U * w) @ V^T (resident)
    b_ref    : (1,) f32               Linear bias (SMEM scalar)
    o_ref    : (1, TB) f32            normalised rating, batch on lanes
    """
    packed = pidx_ref[...]                       # (1, TB)
    uidx = packed >> 16                          # (1, TB) user index
    iidx = packed & 0xFFFF                       # (1, TB) item index
    nu = g_ref.shape[0]
    ni = g_ref.shape[1]
    tb = packed.shape[1]

    # Item gather-as-matmul: one-hot selector (VPU compare) contracted on the MXU.
    oh_i = (lax.broadcasted_iota(jnp.int32, (ni, tb), 0) == iidx).astype(jnp.float32)
    tmp = jnp.dot(g_ref[...], oh_i, preferred_element_type=jnp.float32)  # (NU_PAD, TB)

    # Row select for the user index: masked sublane reduce (VPU select + XLU reduce).
    sel = lax.broadcasted_iota(jnp.int32, (nu, tb), 0) == uidx           # (NU_PAD, TB)
    logits = jnp.sum(jnp.where(sel, tmp, 0.0), axis=0, keepdims=True) + b_ref[0]  # (1, TB)

    y = jax.nn.sigmoid(logits)                                           # EUP
    o_ref[...] = y * NORM_RANGE + NORM_MIN


# ------------------------------- wrapper -------------------------------------
@functools.partial(jax.jit, static_argnames=("tb",))
def gmf_forward(user_indices, item_indices, params, *, tb=None):
    """GMF forward pass; gather + interaction + head collapse into one score-table lookup."""
    emb_user = params["embedding_user"].astype(jnp.float32)   # (NUM_USERS, D)
    emb_item = params["embedding_item"].astype(jnp.float32)   # (NUM_FILMS, D)
    w = params["linear_w"].astype(jnp.float32).reshape(-1)    # (D,)
    b = params["linear_b"].astype(jnp.float32).reshape(1)     # (1,)

    num_users, _ = emb_user.shape
    num_items, _ = emb_item.shape
    nu_pad = _round_up(num_users, 8)
    ni_pad = _round_up(num_items, 8)

    # Bilinear collapse (O(NU*NI*D), tiny):  G[u, i] = sum_d U[u,d] * w[d] * V[i,d]
    g = jnp.zeros((nu_pad, ni_pad), jnp.float32).at[:num_users, :num_items].set(
        (emb_user * w[None, :]) @ emb_item.T)

    # Packed int32 index stream: 4 B/example of input traffic instead of 8 B.
    b_sz = user_indices.shape[0]
    if tb is None:
        tb = _pick_tile(b_sz)
    n_tiles = pl.cdiv(b_sz, tb)
    bp = n_tiles * tb
    packed = (user_indices.astype(jnp.int32) << 16) | item_indices.astype(jnp.int32)
    pidx = jnp.zeros((1, bp), jnp.int32).at[0, :b_sz].set(packed)

    out = pl.pallas_call(
        gmf_kernel,
        out_shape=jax.ShapeDtypeStruct((1, bp), jnp.float32),
        grid_spec=pltpu.PrefetchScalarGridSpec(
            num_scalar_prefetch=0,
            grid=(n_tiles,),
            in_specs=[
                pl.BlockSpec((1, tb), lambda i: (0, i)),            # packed index tile
                pl.BlockSpec((nu_pad, ni_pad), lambda i: (0, 0)),   # score table (resident)
                pl.BlockSpec(memory_space=pltpu.MemorySpace.SMEM),  # bias scalar
            ],
            out_specs=pl.BlockSpec((1, tb), lambda i: (0, i)),
        ),
        compiler_params=pltpu.CompilerParams(
            dimension_semantics=("parallel",),
            vmem_limit_bytes=32 * 1024 * 1024,   # headroom for big tiles on v5e's 16 MiB default
        ),
    )(pidx, g, b)

    # Module-faithful (B, 1) output; for pure throughput, consume out[0, :b_sz] directly.
    return out[0, :b_sz].reshape(b_sz, 1)


# --------------------------- reference (pure JAX) ----------------------------
def gmf_reference(user_indices, item_indices, params):
    u = jnp.take(params["embedding_user"], user_indices, axis=0)
    v = jnp.take(params["embedding_item"], item_indices, axis=0)
    logits = (u * v) @ params["linear_w"].T + params["linear_b"]
    return jax.nn.sigmoid(logits) * NORM_RANGE + NORM_MIN


# ---------------------------------- main -------------------------------------
if __name__ == "__main__":
    key = jax.random.PRNGKey(0)
    k_eu, k_ei, k_w, k_b, k_ui, k_ii = jax.random.split(key, 6)

    # Deterministic synthetic parameters (shapes from the module __init__).
    params = {
        "embedding_user": jax.random.normal(k_eu, (NUM_USERS, EMBED_DIM), jnp.float32),
        "embedding_item": jax.random.normal(k_ei, (NUM_FILMS, EMBED_DIM), jnp.float32),
        "linear_w": jax.random.normal(k_w, (1, EMBED_DIM), jnp.float32) * 0.1,
        "linear_b": jax.random.normal(k_b, (1,), jnp.float32) * 0.1,
    }

    # Small-batch check (single grid step, adaptive tile).
    B = 8
    user_indices = jax.random.randint(k_ui, (B,), 0, NUM_USERS, dtype=jnp.int32)
    item_indices = jax.random.randint(k_ii, (B,), 0, NUM_FILMS, dtype=jnp.int32)

    out = jax.block_until_ready(gmf_forward(user_indices, item_indices, params))
    ref = gmf_reference(user_indices, item_indices, params)
    assert out.shape == (B, 1)
    assert jnp.allclose(out, ref, atol=1e-5, rtol=1e-5), "mismatch vs reference (B=8)"

    # Multi-tile ragged-batch check (grid > 1 via explicit small tile, padded tail).
    B2 = 700
    k_ui2, k_ii2 = jax.random.split(k_ui)
    u2 = jax.random.randint(k_ui2, (B2,), 0, NUM_USERS, dtype=jnp.int32)
    i2 = jax.random.randint(k_ii2, (B2,), 0, NUM_FILMS, dtype=jnp.int32)
    out2 = jax.block_until_ready(gmf_forward(u2, i2, params, tb=256))
    ref2 = gmf_reference(u2, i2, params)
    assert out2.shape == (B2, 1)
    assert jnp.allclose(out2, ref2, atol=1e-5, rtol=1e-5), "mismatch vs reference (B=700)"

    # Larger-batch check with adaptive (fat) tiles: tb is split so >=2 parallel tiles.
    B3 = 9000
    k_ui3, k_ii3 = jax.random.split(k_ii)
    u3 = jax.random.randint(k_ui3, (B3,), 0, NUM_USERS, dtype=jnp.int32)
    i3 = jax.random.randint(k_ii3, (B3,), 0, NUM_FILMS, dtype=jnp.int32)
    out3 = jax.block_until_ready(gmf_forward(u3, i3, params))
    ref3 = gmf_reference(u3, i3, params)
    assert out3.shape == (B3, 1)
    assert jnp.allclose(out3, ref3, atol=1e-5, rtol=1e-5), "mismatch vs reference (B=9000)"

    print("KERNEL_OK")
</pallas_src>

<mosaic_0001>
module attributes {stable_mosaic.version = 11 : i64} {
  func.func @gmf_kernel(%arg0: i32, %arg1: memref<1x256xi32, #tpu.memory_space<vmem>>, %arg2: memref<16x16xf32, #tpu.memory_space<vmem>>, %arg3: memref<1xf32, #tpu.memory_space<smem>>, %arg4: memref<1x256xf32, #tpu.memory_space<vmem>>) attributes {dimension_semantics = [#tpu.dimension_semantics<parallel>], iteration_bounds = array<i64: 1>, scalar_prefetch = 0 : i64, scratch_operands = 0 : i64, tpu.core_type = #tpu.core_type<tc>, window_params = [{transform_indices = @transform_0, window_bounds = array<i64: 1, 256>}, {pipeline_mode = #tpu.pipeline_mode<synchronous>, transform_indices = @transform_1, window_bounds = array<i64: 16, 16>}, {transform_indices = @transform_2, window_bounds = array<i64: 1>}, {transform_indices = @transform_3, window_bounds = array<i64: 1, 256>}]} {
    %c0 = arith.constant 0 : index
    %c0_0 = arith.constant 0 : index
    %0 = vector.load %arg1[%c0, %c0_0] : memref<1x256xi32, #tpu.memory_space<vmem>>, vector<1x256xi32>
    %c16_i32 = arith.constant 16 : i32
    %1 = vector.broadcast %c16_i32 : i32 to vector<1x256xi32>
    %2 = arith.shrsi %0, %1 : vector<1x256xi32>
    %c65535_i32 = arith.constant 65535 : i32
    %3 = vector.broadcast %c65535_i32 : i32 to vector<1x256xi32>
    %4 = arith.andi %0, %3 : vector<1x256xi32>
    %5 = tpu.iota {dimensions = array<i32: 0>} : vector<16x256xi32>
    %6 = vector.broadcast %4 : vector<1x256xi32> to vector<16x256xi32>
    %7 = arith.cmpi eq, %5, %6 : vector<16x256xi32>
    %8 = arith.extui %7 : vector<16x256xi1> to vector<16x256xi32>
    %9 = arith.sitofp %8 : vector<16x256xi32> to vector<16x256xf32>
    %c0_1 = arith.constant 0 : index
    %c0_2 = arith.constant 0 : index
    %10 = vector.load %arg2[%c0_1, %c0_2] : memref<16x16xf32, #tpu.memory_space<vmem>>, vector<16x16xf32>
    %cst = arith.constant dense<0.000000e+00> : vector<16x256xf32>
    %11 = tpu.matmul %10, %9, %cst {dimension_numbers = #tpu.dot_dimension_numbers<[1], [0], [0], [1], [0, 0, 1, 1], [], []>} : vector<16x16xf32>, vector<16x256xf32>, vector<16x256xf32> -> vector<16x256xf32>
    %12 = tpu.iota {dimensions = array<i32: 0>} : vector<16x256xi32>
    %13 = vector.broadcast %2 : vector<1x256xi32> to vector<16x256xi32>
    %14 = arith.cmpi eq, %12, %13 : vector<16x256xi32>
    %cst_3 = arith.constant 0.000000e+00 : f32
    %15 = vector.broadcast %cst_3 : f32 to vector<16x256xf32>
    %16 = arith.select %14, %11, %15 : vector<16x256xi1>, vector<16x256xf32>
    %cst_4 = arith.constant dense<0.000000e+00> : vector<256xf32>
    %17 = vector.multi_reduction <add>, %16, %cst_4 [0] : vector<16x256xf32> to vector<256xf32>
    %18 = vector.shape_cast %17 : vector<256xf32> to vector<1x256xf32>
    %c0_5 = arith.constant 0 : index
    %19 = memref.load %arg3[%c0_5] : memref<1xf32, #tpu.memory_space<smem>>
    %20 = vector.broadcast %19 : f32 to vector<1x256xf32>
    %21 = arith.addf %18, %20 : vector<1x256xf32>
    %22 = arith.negf %21 : vector<1x256xf32>
    %23 = math.exp %22 : vector<1x256xf32>
    %cst_6 = arith.constant 1.000000e+00 : f32
    %24 = vector.broadcast %cst_6 : f32 to vector<1x256xf32>
    %25 = arith.addf %24, %23 : vector<1x256xf32>
    %26 = arith.divf %24, %25 : vector<1x256xf32>
    %cst_7 = arith.constant 5.000000e+00 : f32
    %27 = vector.broadcast %cst_7 : f32 to vector<1x256xf32>
    %28 = arith.mulf %26, %27 : vector<1x256xf32>
    %cst_8 = arith.constant 1.000000e+00 : f32
    %29 = vector.broadcast %cst_8 : f32 to vector<1x256xf32>
    %30 = arith.addf %28, %29 : vector<1x256xf32>
    %c0_9 = arith.constant 0 : index
    %c0_10 = arith.constant 0 : index
    %31 = vector.load %arg4[%c0_9, %c0_10] : memref<1x256xf32, #tpu.memory_space<vmem>>, vector<1x256xf32>
    tpu.vector_store %arg4[%c0_9, %c0_10], %30 {strides = array<i32>} : memref<1x256xf32, #tpu.memory_space<vmem>>, vector<1x256xf32>,
    return
  }
  func.func @transform_0(%arg0: i32) -> (i32, i32) {
    %c0_i32 = arith.constant 0 : i32
    %c0_i32_0 = arith.constant 0 : i32
    return %c0_i32, %arg0 : i32, i32
  }
  func.func @transform_1(%arg0: i32) -> (i32, i32) {
    %c0_i32 = arith.constant 0 : i32
    %c0_i32_0 = arith.constant 0 : i32
    %c0_i32_1 = arith.constant 0 : i32
    return %c0_i32, %c0_i32_0 : i32, i32
  }
  func.func @transform_2(%arg0: i32) -> i32 {
    %c0_i32 = arith.constant 0 : i32
    %c0_i32_0 = arith.constant 0 : i32
    return %c0_i32 : i32
  }
  func.func @transform_3(%arg0: i32) -> (i32, i32) {
    %c0_i32 = arith.constant 0 : i32
    %c0_i32_0 = arith.constant 0 : i32
    return %c0_i32, %arg0 : i32, i32
  }
}

</mosaic_0001>

<llo_original>
// kernel: gmf_forward.1
$region0: #{gmf_forward.1}
  #allocation0 [shape = 'u32[]', space=smem, size = 0x4, offset = 0x4, fixed_abs, tag = 'smem constant byte address 0x4 - core index']
  #allocation1 [shape = 'u32[72,128]{1,0:T(1,128)}', space=vmem, size = 0x9000, scoped, tag = 'internal scratch']
  #allocation2 [shape = 'f32[1]{0:T(128)S(6)}', space=smem, size = 0x200, scoped, tag = 'scoped memory for gmf_forward.1']
  %s0 = inlined_call_operand.vmem [shape: s32[1,256], index: 0, kind: input, shape index: {}]
  %s1 = inlined_call_operand.vmem [shape: f32[16,16], index: 1, kind: input, shape index: {}]
  %s2 = inlined_call_operand.<no memory space> [shape: f32[1], index: 2, kind: input, shape index: {}]
  %s3 = inlined_call_operand.vmem [shape: f32[1,256], index: 3, kind: output, shape index: {}]
  %s4 = sld [smem:[#allocation0]]
  $region22: #{gmf_forward.1} parent=0
    _
  %s6 = ssub.s32 1, %s4
  %s7 = scalar_select 0, %s6, %s4
  %8 = sst [smem:[#allocation2]] %s2
  // Predicated region
  $region2: #{gmf_forward.1} parent=0 // pred_check
    _
  $region3: #{gmf_forward.1} parent=0 // pred_check_branch
    %10 = sbr.rel (0) target = $region5
  $region4: #{gmf_forward.1} parent=0 // pred_region
    _
  $region5: #{gmf_forward.1} parent=0 // pred_fallthru
    _
  // Predicated region
  $region6: #{gmf_forward.1} parent=0 // pred_check
    _
  $region7: #{gmf_forward.1} parent=0 // pred_check_branch
    %12 = sbr.rel (0) target = $region9
  $region8: #{gmf_forward.1} parent=0 // pred_region
    _
  $region9: #{gmf_forward.1} parent=0 // pred_fallthru
    _
  // Predicated region
  $region10: #{gmf_forward.1} parent=0 // pred_check
    _
  $region11: #{gmf_forward.1} parent=0 // pred_check_branch
    %14 = sbr.rel (0) target = $region13
  $region12: #{gmf_forward.1} parent=0 // pred_region
    _
  $region13: #{gmf_forward.1} parent=0 // pred_fallthru
    _
  %v15 = vld [vmem:[%s0] sm:$0x3]
  %v16 = vshra.s32 %v15, 16
  %v17 = vand.u32 %v15, 65535
  %v18 = vlaneseq
  %v19 = vshrl.u32 %v18, 7
  %v20 = vadd.s32 %v19, 8
  %v21 = vperm.slane %v17, 0
  %v22 = vperm.slane %v17, 1
  %vm23 = vcmp.eq.s32.totalorder %v19, %v21
  %vm24 = vcmp.eq.s32.totalorder %v19, %v22
  %vm25 = vcmp.eq.s32.totalorder %v20, %v21
  %vm26 = vcmp.eq.s32.totalorder %v20, %v22
  %v27 = vsel %vm23, 1, 0
  %v28 = vsel %vm24, 1, 0
  %v29 = vsel %vm25, 1, 0
  %v30 = vsel %vm26, 1, 0
  %v31 = vcvt.s32.f32 %v27
  %v32 = vcvt.s32.f32 %v28
  %v33 = vcvt.s32.f32 %v29
  %v34 = vcvt.s32.f32 %v30
  %v35 = vld [vmem:[%s1] sm:$0xff]
  %v36 = vld [vmem:[%s1 + $0x8] sm:$0xff]
  %vm37 = vcmask 130048
  %v39 = vsel %vm37, %v35, 0
  %v42 = vsel %vm37, %v36, 0
  %44 = vmatpush.msra.mxu0 0.0
  %45 = vmatpush.msra.mxu0 0.0
  %46 = vmatpush.msra.mxu0 0.0
  %47 = vmatpush.msra.mxu0 0.0
  %48 = vmatpush.msra.mxu0 0.0
  %49 = vmatpush.msra.mxu0 0.0
  %50 = vmatpush.msra.mxu0 0.0
  %51 = vmatpush.msra.mxu0 0.0
  %52 = vmatpush.msra.mxu0 0.0
  %53 = vmatpush.msra.mxu0 0.0
  %54 = vmatpush.msra.mxu0 0.0
  %55 = vmatpush.msra.mxu0 0.0
  %56 = vmatpush.msra.mxu0 0.0
  %57 = vmatpush.msra.mxu0 0.0
  %58 = vmatpush.msra.mxu0 %v33
  %59 = vmatpush.msra.mxu0 %v31
  %60 = vmatmul.f32.gmra.mxu0 %v39
  %v61 = vpop.f32.mrf.mxu0
  %v62 = vadd.f32 0.0, %v61
  %63 = vmatmul.f32.gmra.mxu0 %v42
  %v64 = vpop.f32.mrf.mxu0
  %v65 = vadd.f32 0.0, %v64
  %66 = vdwg.mxu0
  %67 = vmatpush.msra.mxu0 0.0
  %68 = vmatpush.msra.mxu0 0.0
  %69 = vmatpush.msra.mxu0 0.0
  %70 = vmatpush.msra.mxu0 0.0
  %71 = vmatpush.msra.mxu0 0.0
  %72 = vmatpush.msra.mxu0 0.0
  %73 = vmatpush.msra.mxu0 0.0
  %74 = vmatpush.msra.mxu0 0.0
  %75 = vmatpush.msra.mxu0 0.0
  %76 = vmatpush.msra.mxu0 0.0
  %77 = vmatpush.msra.mxu0 0.0
  %78 = vmatpush.msra.mxu0 0.0
  %79 = vmatpush.msra.mxu0 0.0
  %80 = vmatpush.msra.mxu0 0.0
  %81 = vmatpush.msra.mxu0 %v34
  %82 = vmatpush.msra.mxu0 %v32
  %83 = vmatmul.f32.gmra.mxu0 %v39
  %v84 = vpop.f32.mrf.mxu0
  %v85 = vadd.f32 0.0, %v84
  %86 = vmatmul.f32.gmra.mxu0 %v42
  %v87 = vpop.f32.mrf.mxu0
  %v88 = vadd.f32 0.0, %v87
  %89 = vdwg.mxu0
  %v90 = vperm.slane %v16, 0
  %v91 = vperm.slane %v16, 1
  %vm92 = vcmp.eq.s32.totalorder %v19, %v90
  %vm93 = vcmp.eq.s32.totalorder %v19, %v91
  %vm94 = vcmp.eq.s32.totalorder %v20, %v90
  %vm95 = vcmp.eq.s32.totalorder %v20, %v91
  %v96 = vsel %vm92, %v62, 0.0
  %v97 = vsel %vm93, %v85, 0.0
  %v98 = vsel %vm94, %v65, 0.0
  %v99 = vsel %vm95, %v88, 0.0
  %v100 = vadd.f32 %v96, %v98
  %v101 = vrot.slane %v100, 4
  %v102 = vadd.f32 %v100, %v101
  %v103 = vrot.slane %v102, 2
  %v104 = vadd.f32 %v102, %v103
  %v105 = vrot.slane %v104, 1
  %v106 = vadd.f32 %v104, %v105
  %v107 = vadd.f32 %v97, %v99
  %v108 = vrot.slane %v107, 4
  %v109 = vadd.f32 %v107, %v108
  %v110 = vrot.slane %v109, 2
  %v111 = vadd.f32 %v109, %v110
  %v112 = vrot.slane %v111, 1
  %v113 = vadd.f32 %v111, %v112
  %s114 = sld [smem:[#allocation2]]
  %v115 = vstv %s114
  %v116 = vadd.f32 %v106, %v115
  %v117 = vadd.f32 %v113, %v115
  %v118 = vxor.u32 %v116, 2147483648
  %v119 = vxor.u32 %v117, 2147483648
  %v120 = vmul.f32 %v118, 1.442695
  %v121 = vpow.pop %v120
  %v122 = vmul.f32 %v119, 1.442695
  %v123 = vpow.pop %v122
  %v124 = vadd.f32 %v121, 1.0
  %v125 = vadd.f32 %v123, 1.0
  %v126 = vrcp.pop %v124
  %v127 = vmul.f32 %v124, %v126
  %v128 = vsub.f32 1.0, %v127
  %v129 = vmul.f32 %v126, %v128
  %v130 = vadd.f32 %v126, %v129
  %vm131 = vweird.f32 %v124
  %vm132 = vweird.f32 %v126
  %vm133 = vmor %vm131, %vm132
  %v134 = vsel %vm133, %v126, %v130
  %v135 = vand.u32 2147483647, %v124
  %vm136 = vcmp.eq.f32.partialorder %v135, 8.507059e+37
  %v137 = vand.u32 %v124, 2147483648
  %v138 = vor.u32 1.1754944e-38, %v137
  %v139 = vsel %vm136, %v138, %v134
  %v140 = vmul.f32 1.0, %v139
  %v141 = vrcp.pop %v125
  %v142 = vmul.f32 %v125, %v141
  %v143 = vsub.f32 1.0, %v142
  %v144 = vmul.f32 %v141, %v143
  %v145 = vadd.f32 %v141, %v144
  %vm146 = vweird.f32 %v125
  %vm147 = vweird.f32 %v141
  %vm148 = vmor %vm146, %vm147
  %v149 = vsel %vm148, %v141, %v145
  %v150 = vand.u32 2147483647, %v125
  %vm151 = vcmp.eq.f32.partialorder %v150, 8.507059e+37
  %v152 = vand.u32 %v125, 2147483648
  %v153 = vor.u32 1.1754944e-38, %v152
  %v154 = vsel %vm151, %v153, %v149
  %v155 = vmul.f32 1.0, %v154
  %v156 = vmul.f32 %v140, 5.0
  %v157 = vmul.f32 %v155, 5.0
  %v158 = vadd.f32 %v156, 1.0
  %v159 = vadd.f32 %v157, 1.0
  %v162 = vrot.slane %v159, 7
  %vm163 = vcmask 1040384
  %v164 = vsel %vm163, %v158, %v162
  %v166 = vlaneseq
  %vm167 = vcmp.ge.s32.totalorder %v166, 0
  %vm168 = vcmp.lt.s32.totalorder %v166, 256
  %vm169 = vmand %vm167, %vm168
  %170 = vst.msk [vmem:[%s3] sm:$0x3] %vm169, %v164
  // Predicated region
  $region14: #{gmf_forward.1} parent=0 // pred_check
    _
  $region15: #{gmf_forward.1} parent=0 // pred_check_branch
    %172 = sbr.rel (0) target = $region17
  $region16: #{gmf_forward.1} parent=0 // pred_region
    _
  $region17: #{gmf_forward.1} parent=0 // pred_fallthru
    _
  // Predicated region
  $region18: #{gmf_forward.1} parent=0 // pred_check
    _
  $region19: #{gmf_forward.1} parent=0 // pred_check_branch
    %174 = sbr.rel (0) target = $region21
  $region20: #{gmf_forward.1} parent=0 // pred_region
    _
  $region21: #{gmf_forward.1} parent=0 // pred_fallthru
    _

</llo_original>
